<compile_context>
chip_gen: v5e
topology: v5e:2x2
jax: 0.10.0
libtpu: 0.0.40
codegen_flags: <defaults>
</compile_context>

<pallas_src>
import functools

import jax
import jax.numpy as jnp
import numpy as np
from jax.experimental import pallas as pl
from jax.experimental.pallas import tpu as pltpu


# ---------------------------------------------------------------------------
# Mask construction (glue: deterministic, shape-only math, done in numpy).
# Mirrors the PyTorch `kron` + `checkerboard` mask building exactly.
# ---------------------------------------------------------------------------
def _kron(A: np.ndarray, B: np.ndarray) -> np.ndarray:
    return np.einsum("ab,cd->acbd", A, B).reshape(
        A.shape[0] * B.shape[0], A.shape[1] * B.shape[1]
    )


def build_checkerboard_mask(H, W, drop_size=1, drop_shape="square", drop_mode="ver"):
    shape = round(min(W, H) / 2 * drop_size)
    if drop_shape == "square":
        pat = np.array([[1, 0] * shape, [0, 1] * shape] * shape, dtype=np.float32)
        mask = _kron(pat, np.ones((shape, shape), dtype=np.float32))
    elif drop_shape == "rectangle":
        if drop_mode == "ver":
            pat = np.array(
                [[1, 0] * int(shape / 2), [0, 1] * int(shape / 2)] * (2 * shape),
                dtype=np.float32,
            )
            mask = _kron(pat, np.ones((shape, 2 * shape), dtype=np.float32))
        else:
            pat = np.array(
                [[1, 0] * (2 * shape), [0, 1] * (2 * shape)] * int(shape / 2),
                dtype=np.float32,
            )
            mask = _kron(pat, np.ones((2 * shape, shape), dtype=np.float32))
    else:
        raise ValueError(f"unknown drop_shape: {drop_shape}")
    return mask[:H, :W]


# ---------------------------------------------------------------------------
# Pallas kernel: one broadcasted multiply per block (HBM-bandwidth bound).
# ---------------------------------------------------------------------------
def _checkerboard_kernel(x_ref, m_ref, o_ref):
    # x_ref: (TB, TL) rows of x (lanes = flattened C*H*W slice)
    # m_ref: (1, TL)  precomputed keep-or-checkerboard multiplier (x.dtype)
    o_ref[...] = x_ref[...] * m_ref[...]


def _largest_lane_tile(cl, cap):
    """Largest divisor of `cl` that is a multiple of 128 and <= cap (cl if cap >= cl)."""
    if cap >= cl:
        return cl
    best = 128
    d = 128
    while d <= cap:
        if cl % d == 0:
            best = d
        d += 128
    return best


def checkerboard_pallas(x, rand_c, mask_hw, drop_prob, *, target_block_bytes=8 << 20):
    """x: (B, C, H, W); rand_c: (C,) float32 uniform draws; mask_hw: (H, W)."""
    B, C, H, W = x.shape
    assert mask_hw.shape == (H, W), (
        f"checkerboard mask has shape {mask_hw.shape}, expected {(H, W)}; "
        "this H/W/drop_size/drop_shape combination is not supported (mirrors the "
        "PyTorch module's quirk)."
    )
    L = H * W
    CL = C * L
    itemsize = jnp.dtype(x.dtype).itemsize
    sub = 32 if itemsize == 1 else (16 if itemsize == 2 else 8)

    # --- Wrapper-side layout plumbing (cheap reshapes + a tiny (C, L) select) ---
    x2 = x.reshape(B, CL)
    keep_c = rand_c.astype(jnp.float32).reshape(C, 1) >= jnp.float32(drop_prob)
    mask_flat = mask_hw.astype(x.dtype).reshape(1, L)
    mult = jnp.where(keep_c, jnp.ones((1, L), dtype=x.dtype), mask_flat)  # (C, L)
    mult = mult.reshape(1, CL)

    # --- Lane tiling: keep lane-dense; tile only in exact 128-multiples dividing CL.
    if CL % 128 == 0:
        lane_cap = max(128, (target_block_bytes // max(1, sub * itemsize)) // 128 * 128)
        TL = _largest_lane_tile(CL, lane_cap)
    else:
        # TODO(synk): if CL is not a multiple of 128 AND sub*CL*itemsize vastly exceeds
        # VMEM (pathological huge odd spatial planes), a masked ragged lane tile would
        # be needed; full-extent lanes are used here.
        TL = CL
    n_lane = CL // TL

    # --- Row tiling: hit the byte target; ragged last block is clipped by Pallas.
    rows_target = max(1, target_block_bytes // max(1, TL * itemsize))
    if rows_target >= B:
        TB = B
    else:
        TB = max(sub, (rows_target // sub) * sub)
        TB = min(TB, B)
    # Keep >= 2 grid steps when possible so both v7x TensorCores get work.
    if n_lane == 1 and TB == B and B >= 2 * sub:
        half = -(-B // 2)
        TB = min(B, ((half + sub - 1) // sub) * sub)
    n_row = -(-B // TB)  # cdiv

    block_bytes = TB * TL * itemsize
    vmem_limit = 4 * block_bytes + 2 * TL * itemsize + (4 << 20)
    vmem_limit = int(min(max(vmem_limit, 16 << 20), 64 << 20))

    cost = pl.CostEstimate(
        flops=int(B) * int(CL),
        transcendentals=0,
        bytes_accessed=2 * int(B) * int(CL) * itemsize + int(CL) * itemsize,
    )

    out2 = pl.pallas_call(
        _checkerboard_kernel,
        out_shape=jax.ShapeDtypeStruct((B, CL), x.dtype),
        grid=(n_row, n_lane),
        in_specs=[
            pl.BlockSpec((TB, TL), lambda i, j: (i, j)),  # x rows (lane-dense)
            pl.BlockSpec((1, TL), lambda i, j: (0, j)),   # multiplier (resident per lane-tile)
        ],
        out_specs=pl.BlockSpec((TB, TL), lambda i, j: (i, j)),
        compiler_params=pltpu.CompilerParams(
            dimension_semantics=("parallel", "parallel"),
            vmem_limit_bytes=vmem_limit,
        ),
        cost_estimate=cost,
    )(x2, mult)
    return out2.reshape(B, C, H, W)


# ---------------------------------------------------------------------------
# Module-equivalent wrapper.
# ---------------------------------------------------------------------------
class Checkerboard:
    def __init__(self, drop_prob, drop_size, drop_shape, drop_mode):
        self.drop_prob = drop_prob
        self.drop_size = drop_size
        self.drop_shape = drop_shape
        self.drop_mode = drop_mode
        self.training = True

    def __call__(self, x, rng_key):
        assert x.ndim == 4, "Expected input with 4 dimensions (B, C, H, W)"
        if not self.training or self.drop_prob == 0.0:
            return x
        B, C, H, W = x.shape
        # Per-channel uniform draw (torch.rand((1, C, 1, 1))); drawn in float32 so
        # bf16 inputs keep full-resolution randomness.
        rand_c = jax.random.uniform(rng_key, (C,), dtype=jnp.float32)
        mask = jnp.asarray(
            build_checkerboard_mask(
                H, W, self.drop_size, self.drop_shape, self.drop_mode
            ),
            dtype=x.dtype,
        )
        return checkerboard_pallas(x, rand_c, mask, self.drop_prob)


# ---------------------------------------------------------------------------
# Pure-JAX reference for verification.
# ---------------------------------------------------------------------------
def checkerboard_ref(x, rand_c, mask, drop_prob):
    keep = rand_c.reshape(1, -1, 1, 1) >= drop_prob  # (1, C, 1, 1)
    return jnp.where(keep, x, x * mask.astype(x.dtype)[None, None, :, :])


if __name__ == "__main__":
    key = jax.random.PRNGKey(0)
    kx, kr = jax.random.split(key)

    B, C, H, W = 2, 4, 16, 16
    x = jax.random.normal(kx, (B, C, H, W), dtype=jnp.float32)

    drop_prob, drop_size, drop_shape, drop_mode = 0.5, 1, "square", "ver"
    module = Checkerboard(drop_prob, drop_size, drop_shape, drop_mode)
    module.training = True

    out = jax.block_until_ready(module(x, kr))

    # Verify against pure-JAX reference with identical randomness / mask.
    rand_c = jax.random.uniform(kr, (C,), dtype=jnp.float32)
    mask = jnp.asarray(
        build_checkerboard_mask(H, W, drop_size, drop_shape, drop_mode),
        dtype=jnp.float32,
    )
    ref = checkerboard_ref(x, rand_c, mask, drop_prob)
    np.testing.assert_allclose(np.asarray(out), np.asarray(ref), rtol=1e-6, atol=1e-6)

    print("KERNEL_OK")
</pallas_src>

<mosaic_0001>
module attributes {stable_mosaic.version = 11 : i64} {
  func.func @_checkerboard_kernel(%arg0: i32, %arg1: i32, %arg2: memref<2x1024xf32, #tpu.memory_space<vmem>>, %arg3: memref<1x1024xf32, #tpu.memory_space<vmem>>, %arg4: memref<2x1024xf32, #tpu.memory_space<vmem>>) attributes {dimension_semantics = [#tpu.dimension_semantics<parallel>, #tpu.dimension_semantics<parallel>], iteration_bounds = array<i64: 1, 1>, scalar_prefetch = 0 : i64, scratch_operands = 0 : i64, tpu.core_type = #tpu.core_type<tc>, window_params = [{transform_indices = @transform_0, window_bounds = array<i64: 2, 1024>}, {transform_indices = @transform_1, window_bounds = array<i64: 1, 1024>}, {transform_indices = @transform_2, window_bounds = array<i64: 2, 1024>}]} {
    %c0 = arith.constant 0 : index
    %c0_0 = arith.constant 0 : index
    %0 = vector.load %arg2[%c0, %c0_0] : memref<2x1024xf32, #tpu.memory_space<vmem>>, vector<2x1024xf32>
    %c0_1 = arith.constant 0 : index
    %c0_2 = arith.constant 0 : index
    %1 = vector.load %arg3[%c0_1, %c0_2] : memref<1x1024xf32, #tpu.memory_space<vmem>>, vector<1x1024xf32>
    %2 = vector.broadcast %1 : vector<1x1024xf32> to vector<2x1024xf32>
    %3 = arith.mulf %0, %2 : vector<2x1024xf32>
    %c0_3 = arith.constant 0 : index
    %c0_4 = arith.constant 0 : index
    %4 = vector.load %arg4[%c0_3, %c0_4] : memref<2x1024xf32, #tpu.memory_space<vmem>>, vector<2x1024xf32>
    tpu.vector_store %arg4[%c0_3, %c0_4], %3 {strides = array<i32>} : memref<2x1024xf32, #tpu.memory_space<vmem>>, vector<2x1024xf32>,
    return
  }
  func.func @transform_0(%arg0: i32, %arg1: i32) -> (i32, i32) {
    %c0_i32 = arith.constant 0 : i32
    return %arg0, %arg1 : i32, i32
  }
  func.func @transform_1(%arg0: i32, %arg1: i32) -> (i32, i32) {
    %c0_i32 = arith.constant 0 : i32
    %c0_i32_0 = arith.constant 0 : i32
    return %c0_i32, %arg1 : i32, i32
  }
  func.func @transform_2(%arg0: i32, %arg1: i32) -> (i32, i32) {
    %c0_i32 = arith.constant 0 : i32
    return %arg0, %arg1 : i32, i32
  }
}

</mosaic_0001>

<llo_original>
// kernel: tpu_custom_call.1
$region0: #{tpu_custom_call.1}
  #allocation0 [shape = 'u32[]', space=smem, size = 0x4, offset = 0x4, fixed_abs, tag = 'smem constant byte address 0x4 - core index']
  #allocation1 [shape = 'u32[72,128]{1,0:T(1,128)}', space=vmem, size = 0x9000, scoped, tag = 'internal scratch']
  %s0 = inlined_call_operand.hbm [shape: f32[2,1024], index: 0, kind: input, shape index: {}]
  %s1 = inlined_call_operand.hbm [shape: f32[1,1024], index: 1, kind: input, shape index: {}]
  %s2 = inlined_call_operand.hbm [shape: f32[2,1024], index: 2, kind: output, shape index: {}]
  %s3 = sld [smem:[#allocation0]]
  $region26: #{tpu_custom_call.1} parent=0
    _
  %s5 = ssub.s32 1, %s3
  %s6 = scalar_select 0, %s5, %s3
  $region1: #{tpu_custom_call.1} parent=0
    #allocation2 [shape = 'u8[8192]{0}', space=vmem, size = 0x2000, scoped, tag = 'input window, operand 0, single buffered']
    #allocation3 [shape = 's32[1]{0}', space=sflag, size = 0x4, scoped, tag = 'scoped memory for tpu_custom_call.1']
    #allocation4 [shape = 's32[1]{0}', space=sflag, size = 0x4, scoped, tag = 'scoped memory for tpu_custom_call.1']
    #allocation5 [shape = 'u8[4096]{0}', space=vmem, size = 0x1000, scoped, tag = 'input window, operand 1, single buffered']
    #allocation6 [shape = 's32[1]{0}', space=sflag, size = 0x4, scoped, tag = 'scoped memory for tpu_custom_call.1']
    #allocation7 [shape = 'u8[8192]{0}', space=vmem, size = 0x2000, scoped, tag = 'output window, operand 0, single buffered']
    %7 = vsyncpa [#allocation3], 0
    %8 = vsyncpa [#allocation6], 0
    %9 = vsyncpa [#allocation4], 0
    // Predicated region
    $region2: #{tpu_custom_call.1} parent=1 // pred_check
      _
    $region3: #{tpu_custom_call.1} parent=1 // pred_check_branch
      %11 = sbr.rel (0) target = $region5
    $region4: #{tpu_custom_call.1} parent=1 // pred_region
      %13 = vsyncadd [#allocation3], 0
      %s15 = sshll.u32 %s0, 4
      %s16 = int_to_ptr.hbm [resolvable:$true] %s15
      %s17 = sshll.u32 [#allocation2], 4
      %s18 = int_to_ptr.vmem [resolvable:$true] %s17
      %20 = dma.hbm_to_vmem [thread:$0]  %s16, 256, %s18, [#allocation3]
    $region5: #{tpu_custom_call.1} parent=1 // pred_fallthru
      _
    // Predicated region
    $region6: #{tpu_custom_call.1} parent=1 // pred_check
      _
    $region7: #{tpu_custom_call.1} parent=1 // pred_check_branch
      %22 = sbr.rel (0) target = $region9
    $region8: #{tpu_custom_call.1} parent=1 // pred_region
      %24 = vsyncadd [#allocation6], 0
      %s26 = sshll.u32 %s1, 4
      %s27 = int_to_ptr.hbm [resolvable:$true] %s26
      %s28 = sshll.u32 [#allocation5], 4
      %s29 = int_to_ptr.vmem [resolvable:$true] %s28
      %31 = dma.hbm_to_vmem [thread:$0]  %s27, 128, %s29, [#allocation6]
    $region9: #{tpu_custom_call.1} parent=1 // pred_fallthru
      _
    // Predicated region
    $region10: #{tpu_custom_call.1} parent=1 // pred_check
      _
    $region11: #{tpu_custom_call.1} parent=1 // pred_check_branch
      %33 = sbr.rel (0) target = $region13
    $region12: #{tpu_custom_call.1} parent=1 // pred_region
      %35 = dma.done [#allocation3], 256
    $region13: #{tpu_custom_call.1} parent=1 // pred_fallthru
      _
    // Predicated region
    $region14: #{tpu_custom_call.1} parent=1 // pred_check
      _
    $region15: #{tpu_custom_call.1} parent=1 // pred_check_branch
      %37 = sbr.rel (0) target = $region17
    $region16: #{tpu_custom_call.1} parent=1 // pred_region
      %39 = dma.done [#allocation6], 128
    $region17: #{tpu_custom_call.1} parent=1 // pred_fallthru
      _
    %v40 = vld [vmem:[#allocation2] sm:$0xff]
    %v41 = vld [vmem:[#allocation2 + $0x8] sm:$0xff]
    %v42 = vld [vmem:[#allocation5] sm:$0xff]
    %v44 = vperm.slane %v42, 0
    %v45 = vperm.slane %v42, 1
    %v46 = vperm.slane %v42, 2
    %v47 = vperm.slane %v42, 3
    %v48 = vperm.slane %v42, 4
    %v49 = vperm.slane %v42, 5
    %v50 = vperm.slane %v42, 6
    %v51 = vperm.slane %v42, 7
    %v52 = vrot.slane %v45, 6
    %v53 = vrot.slane %v46, 4
    %v54 = vrot.slane %v47, 2
    %v55 = vrot.slane %v49, 6
    %v56 = vrot.slane %v50, 4
    %v57 = vrot.slane %v51, 2
    %vm58 = vcmask 1041408
    %v59 = vsel %vm58, %v44, %v52
    %vm60 = vcmask 1045508
    %v61 = vsel %vm60, %v53, %v54
    %vm62 = vcmask 1043456
    %v63 = vsel %vm62, %v59, %v61
    %v64 = vsel %vm58, %v48, %v55
    %v65 = vsel %vm60, %v56, %v57
    %v66 = vsel %vm62, %v64, %v65
    %v69 = vmul.f32 %v40, %v63
    %v70 = vmul.f32 %v41, %v66
    %71 = vst [vmem:[#allocation7] sm:$0xff] %v69
    %72 = vst [vmem:[#allocation7 + $0x8] sm:$0xff] %v70
    // Predicated region
    $region18: #{tpu_custom_call.1} parent=1 // pred_check
      _
    $region19: #{tpu_custom_call.1} parent=1 // pred_check_branch
      %74 = sbr.rel (0) target = $region21
    $region20: #{tpu_custom_call.1} parent=1 // pred_region
      %76 = vsyncadd [#allocation4], 0
      %s78 = sshll.u32 [#allocation7], 4
      %s79 = int_to_ptr.vmem [resolvable:$true] %s78
      %s80 = sshll.u32 %s2, 4
      %s81 = int_to_ptr.hbm [resolvable:$true] %s80
      %83 = dma.vmem_to_hbm [thread:$0]  %s79, 256, %s81, [#allocation4]
    $region21: #{tpu_custom_call.1} parent=1 // pred_fallthru
      _
    // Predicated region
    $region22: #{tpu_custom_call.1} parent=1 // pred_check
      _
    $region23: #{tpu_custom_call.1} parent=1 // pred_check_branch
      %85 = sbr.rel (0) target = $region25
    $region24: #{tpu_custom_call.1} parent=1 // pred_region
      %87 = dma.done [#allocation4], 256
    $region25: #{tpu_custom_call.1} parent=1 // pred_fallthru
      _
    %88 = vsyncpa [#allocation3], 1
    %89 = vsyncpa [#allocation6], 1
    %90 = vsyncpa [#allocation4], 1

</llo_original>
